<compile_context>
chip_gen: v6e
topology: v6e:2x2x1
jax: 0.10.0
libtpu: 0.0.40
codegen_flags: <defaults>
</compile_context>

<pallas_src>
import math
import functools

import jax
import jax.numpy as jnp
from jax.experimental import pallas as pl
from jax.experimental.pallas import tpu as pltpu


# ---------------------------------------------------------------------------
# Kernels
# ---------------------------------------------------------------------------
def _gather_rows(ids_ref, emb_ref, gath_ref, *, base, tile, vocab, n_ids):
    """Gather `tile` rows of the VMEM-resident table into scratch, ids from SMEM."""
    def body(r, carry):
        idx = jnp.minimum(base + r, n_ids - 1)        # guard partial trailing tile
        tok = ids_ref[idx]                            # scalar read from SMEM
        tok = jnp.clip(tok, 0, vocab - 1)             # guard out-of-range token ids
        gath_ref[pl.ds(r, 1), :] = emb_ref[pl.ds(tok, 1), :].astype(jnp.float32)
        return carry

    jax.lax.fori_loop(0, tile, body, 0, unroll=(tile <= 64))


def _emb_fc_kernel(ids_ref, emb_ref, pe_ref, w_ref, b_ref, out_ref, gath_ref,
                   *, scale, seq_len, tile, vocab, n_ids):
    """out = (gather(table)[tok] * scale + pe) @ W + b   (emb_dim != hidden_dim path)."""
    b = pl.program_id(0)
    s = pl.program_id(1)
    base = b * seq_len + s * tile

    _gather_rows(ids_ref, emb_ref, gath_ref,
                 base=base, tile=tile, vocab=vocab, n_ids=n_ids)

    x = gath_ref[...] * scale + pe_ref[...]                       # (TS, E) f32, VPU
    out = jnp.dot(x, w_ref[...], preferred_element_type=jnp.float32) + b_ref[...]
    out_ref[0, :, :] = out.astype(out_ref.dtype)


def _emb_nofc_kernel(ids_ref, emb_ref, pe_ref, out_ref, gath_ref,
                     *, scale, seq_len, tile, vocab, n_ids):
    """out = gather(table)[tok] * scale + pe   (emb_dim == hidden_dim path)."""
    b = pl.program_id(0)
    s = pl.program_id(1)
    base = b * seq_len + s * tile

    _gather_rows(ids_ref, emb_ref, gath_ref,
                 base=base, tile=tile, vocab=vocab, n_ids=n_ids)

    out_ref[0, :, :] = (gath_ref[...] * scale + pe_ref[...]).astype(out_ref.dtype)


# ---------------------------------------------------------------------------
# Wrapper (glue: PE table construction, tiling, pallas_call setup)
# ---------------------------------------------------------------------------
def make_positional_encoding(full_len, emb_dim):
    """Same formula as the PyTorch PositionalEncoding buffer -> (full_len, emb_dim)."""
    assert emb_dim % 2 == 0, "PositionalEncoding assumes an even emb_dim (as in torch)"
    position = jnp.arange(full_len, dtype=jnp.float32)[:, None]            # (L, 1)
    div_term = jnp.exp(jnp.arange(0, emb_dim, 2, dtype=jnp.float32)
                       * (-math.log(10000.0) / emb_dim))                   # (E/2,)
    sin = jnp.sin(position * div_term)                                     # (L, E/2)
    cos = jnp.cos(position * div_term)                                     # (L, E/2)
    pe = jnp.stack([sin, cos], axis=-1).reshape(full_len, emb_dim)         # interleave
    return pe


def _pick_seq_tile(S):
    for cand in (512, 256, 128, 64, 32, 16, 8):
        if S % cand == 0:
            return cand
    return S


def embeddings_forward(tok_ids, emb_table, pe_full, fc_w=None, fc_b=None, *, seq_tile=None):
    """tok_ids: (B, S) int32 -> (B, S, H) float32.  fc_w stored as (E, H), fc_b as (1, H)."""
    B, S = tok_ids.shape
    V, E = emb_table.shape
    scale = float(math.sqrt(E))
    use_fc = fc_w is not None
    H = fc_w.shape[1] if use_fc else E

    TS = seq_tile or _pick_seq_tile(S)
    grid = (B, pl.cdiv(S, TS))
    N = B * S

    ids_flat = tok_ids.reshape(N).astype(jnp.int32)         # -> SMEM via scalar prefetch
    pe_slice = pe_full[:S, :].astype(jnp.float32)           # (S, E), no batch broadcast

    # VMEM budget: resident table/weights + double-buffered per-tile blocks + scratch.
    resident = V * E + (E * H + H if use_fc else 0)
    per_tile = TS * E + TS * H + TS * E
    vmem_limit = int(min(max(8 * (resident + 2 * per_tile), 32 * 2**20), 96 * 2**20))

    common = dict(scale=scale, seq_len=S, tile=TS, vocab=V, n_ids=N)

    emb_spec = pl.BlockSpec((V, E), lambda b, s, ids: (0, 0))     # resident across grid
    pe_spec = pl.BlockSpec((TS, E), lambda b, s, ids: (s, 0))     # seq-indexed only

    if use_fc:
        kernel = functools.partial(_emb_fc_kernel, **common)
        in_specs = [
            emb_spec,
            pe_spec,
            pl.BlockSpec((E, H), lambda b, s, ids: (0, 0)),       # fc weight, resident
            pl.BlockSpec((1, H), lambda b, s, ids: (0, 0)),       # fc bias, resident
        ]
        operands = (emb_table, pe_slice, fc_w, fc_b)
    else:
        kernel = functools.partial(_emb_nofc_kernel, **common)
        in_specs = [emb_spec, pe_spec]
        operands = (emb_table, pe_slice)

    grid_spec = pltpu.PrefetchScalarGridSpec(
        num_scalar_prefetch=1,                                    # token ids -> SMEM
        grid=grid,
        in_specs=in_specs,
        out_specs=pl.BlockSpec((1, TS, H), lambda b, s, ids: (b, s, 0)),
        scratch_shapes=[pltpu.VMEM((TS, E), jnp.float32)],        # gathered rows
    )

    out = pl.pallas_call(
        kernel,
        out_shape=jax.ShapeDtypeStruct((B, S, H), jnp.float32),
        grid_spec=grid_spec,
        compiler_params=pltpu.CompilerParams(
            dimension_semantics=("parallel", "parallel"),
            vmem_limit_bytes=vmem_limit,
        ),
    )(ids_flat, *operands)
    return out


# ---------------------------------------------------------------------------
# Demo
# ---------------------------------------------------------------------------
if __name__ == "__main__":
    # Config (small): vocab_size=32, emb_dim=16, hidden_dim=32 (!= emb_dim -> fc path),
    # full_len=16, seq=8, batch=2, dropout_ratio=0.1 (identity in eval).
    vocab_size, emb_dim, hidden_dim, full_len = 32, 16, 32, 16
    B, S = 2, 8

    key = jax.random.PRNGKey(0)
    k_tok, k_emb, k_w, k_b, k_tok2, k_emb2 = jax.random.split(key, 6)

    tok_ids = jax.random.randint(k_tok, (B, S), 0, vocab_size, dtype=jnp.int32)
    emb_table = jax.random.normal(k_emb, (vocab_size, emb_dim), dtype=jnp.float32)
    # nn.Linear-like init (uniform), stored transposed as (E, H).
    bound = 1.0 / math.sqrt(emb_dim)
    fc_w = jax.random.uniform(k_w, (emb_dim, hidden_dim), jnp.float32, -bound, bound)
    fc_b = jax.random.uniform(k_b, (1, hidden_dim), jnp.float32, -bound, bound)
    pe_full = make_positional_encoding(full_len, emb_dim)

    # --- fc path ---
    out = embeddings_forward(tok_ids, emb_table, pe_full, fc_w, fc_b)
    out = jax.block_until_ready(out)

    ref_emb = emb_table[tok_ids] * math.sqrt(emb_dim) + pe_full[:S][None, :, :]
    ref = ref_emb @ fc_w + fc_b[0]
    assert out.shape == (B, S, hidden_dim)
    assert jnp.allclose(out, ref, atol=1e-4, rtol=1e-4), "fc path mismatch vs reference"

    # --- no-fc path (emb_dim == hidden_dim) ---
    emb_dim2 = 32
    tok_ids2 = jax.random.randint(k_tok2, (B, S), 0, vocab_size, dtype=jnp.int32)
    emb_table2 = jax.random.normal(k_emb2, (vocab_size, emb_dim2), dtype=jnp.float32)
    pe_full2 = make_positional_encoding(full_len, emb_dim2)

    out2 = jax.block_until_ready(embeddings_forward(tok_ids2, emb_table2, pe_full2))
    ref2 = emb_table2[tok_ids2] * math.sqrt(emb_dim2) + pe_full2[:S][None, :, :]
    assert out2.shape == (B, S, emb_dim2)
    assert jnp.allclose(out2, ref2, atol=1e-4, rtol=1e-4), "no-fc path mismatch vs reference"

    print("KERNEL_OK")
</pallas_src>

<mosaic_0001>
module attributes {stable_mosaic.version = 11 : i64} {
  func.func @_emb_fc_kernel(%arg0: i32, %arg1: i32, %arg2: memref<16xi32, #tpu.memory_space<smem>>, %arg3: memref<32x16xf32, #tpu.memory_space<vmem>>, %arg4: memref<8x16xf32, #tpu.memory_space<vmem>>, %arg5: memref<16x32xf32, #tpu.memory_space<vmem>>, %arg6: memref<1x32xf32, #tpu.memory_space<vmem>>, %arg7: memref<1x8x32xf32, #tpu.memory_space<vmem>>, %arg8: memref<8x16xf32, #tpu.memory_space<vmem>>) attributes {dimension_semantics = [#tpu.dimension_semantics<parallel>, #tpu.dimension_semantics<parallel>], iteration_bounds = array<i64: 2, 1>, scalar_prefetch = 1 : i64, scratch_operands = 1 : i64, tpu.core_type = #tpu.core_type<tc>, window_params = [{pipeline_mode = #tpu.pipeline_mode<synchronous>, transform_indices = @transform_0, window_bounds = array<i64: 32, 16>}, {transform_indices = @transform_1, window_bounds = array<i64: 8, 16>}, {pipeline_mode = #tpu.pipeline_mode<synchronous>, transform_indices = @transform_2, window_bounds = array<i64: 16, 32>}, {pipeline_mode = #tpu.pipeline_mode<synchronous>, transform_indices = @transform_3, window_bounds = array<i64: 1, 32>}, {transform_indices = @transform_4, window_bounds = array<i64: 1, 8, 32>}]} {
    %c8_i32 = arith.constant 8 : i32
    %0 = arith.muli %arg0, %c8_i32 : i32
    %c8_i32_0 = arith.constant 8 : i32
    %1 = arith.muli %arg1, %c8_i32_0 : i32
    %2 = arith.addi %0, %1 : i32
    %c0_i32 = arith.constant 0 : i32
    %3 = arith.addi %2, %c0_i32 : i32
    %c15_i32 = arith.constant 15 : i32
    %4 = arith.minsi %3, %c15_i32 : i32
    %5 = arith.index_cast %4 : i32 to index
    %6 = memref.load %arg2[%5] : memref<16xi32, #tpu.memory_space<smem>>
    %c0_i32_1 = arith.constant 0 : i32
    %c31_i32 = arith.constant 31 : i32
    %7 = arith.maxsi %c0_i32_1, %6 : i32
    %8 = arith.minsi %c31_i32, %7 : i32
    %9 = arith.index_cast %8 : i32 to index
    %c0 = arith.constant 0 : index
    %10 = vector.load %arg3[%9, %c0] : memref<32x16xf32, #tpu.memory_space<vmem>>, vector<1x16xf32>
    %11 = arith.index_cast %c0_i32 : i32 to index
    %c0_2 = arith.constant 0 : index
    %12 = vector.load %arg8[%11, %c0_2] : memref<8x16xf32, #tpu.memory_space<vmem>>, vector<1x16xf32>
    tpu.vector_store %arg8[%11, %c0_2], %10 {strides = array<i32>} : memref<8x16xf32, #tpu.memory_space<vmem>>, vector<1x16xf32>,
    %c1_i32 = arith.constant 1 : i32
    %13 = arith.addi %2, %c1_i32 : i32
    %c15_i32_3 = arith.constant 15 : i32
    %14 = arith.minsi %13, %c15_i32_3 : i32
    %15 = arith.index_cast %14 : i32 to index
    %16 = memref.load %arg2[%15] : memref<16xi32, #tpu.memory_space<smem>>
    %c0_i32_4 = arith.constant 0 : i32
    %c31_i32_5 = arith.constant 31 : i32
    %17 = arith.maxsi %c0_i32_4, %16 : i32
    %18 = arith.minsi %c31_i32_5, %17 : i32
    %19 = arith.index_cast %18 : i32 to index
    %c0_6 = arith.constant 0 : index
    %20 = vector.load %arg3[%19, %c0_6] : memref<32x16xf32, #tpu.memory_space<vmem>>, vector<1x16xf32>
    %21 = arith.index_cast %c1_i32 : i32 to index
    %c0_7 = arith.constant 0 : index
    %22 = vector.load %arg8[%21, %c0_7] : memref<8x16xf32, #tpu.memory_space<vmem>>, vector<1x16xf32>
    tpu.vector_store %arg8[%21, %c0_7], %20 {strides = array<i32>} : memref<8x16xf32, #tpu.memory_space<vmem>>, vector<1x16xf32>,
    %c2_i32 = arith.constant 2 : i32
    %23 = arith.addi %2, %c2_i32 : i32
    %c15_i32_8 = arith.constant 15 : i32
    %24 = arith.minsi %23, %c15_i32_8 : i32
    %25 = arith.index_cast %24 : i32 to index
    %26 = memref.load %arg2[%25] : memref<16xi32, #tpu.memory_space<smem>>
    %c0_i32_9 = arith.constant 0 : i32
    %c31_i32_10 = arith.constant 31 : i32
    %27 = arith.maxsi %c0_i32_9, %26 : i32
    %28 = arith.minsi %c31_i32_10, %27 : i32
    %29 = arith.index_cast %28 : i32 to index
    %c0_11 = arith.constant 0 : index
    %30 = vector.load %arg3[%29, %c0_11] : memref<32x16xf32, #tpu.memory_space<vmem>>, vector<1x16xf32>
    %31 = arith.index_cast %c2_i32 : i32 to index
    %c0_12 = arith.constant 0 : index
    %32 = vector.load %arg8[%31, %c0_12] : memref<8x16xf32, #tpu.memory_space<vmem>>, vector<1x16xf32>
    tpu.vector_store %arg8[%31, %c0_12], %30 {strides = array<i32>} : memref<8x16xf32, #tpu.memory_space<vmem>>, vector<1x16xf32>,
    %c3_i32 = arith.constant 3 : i32
    %33 = arith.addi %2, %c3_i32 : i32
    %c15_i32_13 = arith.constant 15 : i32
    %34 = arith.minsi %33, %c15_i32_13 : i32
    %35 = arith.index_cast %34 : i32 to index
    %36 = memref.load %arg2[%35] : memref<16xi32, #tpu.memory_space<smem>>
    %c0_i32_14 = arith.constant 0 : i32
    %c31_i32_15 = arith.constant 31 : i32
    %37 = arith.maxsi %c0_i32_14, %36 : i32
    %38 = arith.minsi %c31_i32_15, %37 : i32
    %39 = arith.index_cast %38 : i32 to index
    %c0_16 = arith.constant 0 : index
    %40 = vector.load %arg3[%39, %c0_16] : memref<32x16xf32, #tpu.memory_space<vmem>>, vector<1x16xf32>
    %41 = arith.index_cast %c3_i32 : i32 to index
    %c0_17 = arith.constant 0 : index
    %42 = vector.load %arg8[%41, %c0_17] : memref<8x16xf32, #tpu.memory_space<vmem>>, vector<1x16xf32>
    tpu.vector_store %arg8[%41, %c0_17], %40 {strides = array<i32>} : memref<8x16xf32, #tpu.memory_space<vmem>>, vector<1x16xf32>,
    %c4_i32 = arith.constant 4 : i32
    %43 = arith.addi %2, %c4_i32 : i32
    %c15_i32_18 = arith.constant 15 : i32
    %44 = arith.minsi %43, %c15_i32_18 : i32
    %45 = arith.index_cast %44 : i32 to index
    %46 = memref.load %arg2[%45] : memref<16xi32, #tpu.memory_space<smem>>
    %c0_i32_19 = arith.constant 0 : i32
    %c31_i32_20 = arith.constant 31 : i32
    %47 = arith.maxsi %c0_i32_19, %46 : i32
    %48 = arith.minsi %c31_i32_20, %47 : i32
    %49 = arith.index_cast %48 : i32 to index
    %c0_21 = arith.constant 0 : index
    %50 = vector.load %arg3[%49, %c0_21] : memref<32x16xf32, #tpu.memory_space<vmem>>, vector<1x16xf32>
    %51 = arith.index_cast %c4_i32 : i32 to index
    %c0_22 = arith.constant 0 : index
    %52 = vector.load %arg8[%51, %c0_22] : memref<8x16xf32, #tpu.memory_space<vmem>>, vector<1x16xf32>
    tpu.vector_store %arg8[%51, %c0_22], %50 {strides = array<i32>} : memref<8x16xf32, #tpu.memory_space<vmem>>, vector<1x16xf32>,
    %c5_i32 = arith.constant 5 : i32
    %53 = arith.addi %2, %c5_i32 : i32
    %c15_i32_23 = arith.constant 15 : i32
    %54 = arith.minsi %53, %c15_i32_23 : i32
    %55 = arith.index_cast %54 : i32 to index
    %56 = memref.load %arg2[%55] : memref<16xi32, #tpu.memory_space<smem>>
    %c0_i32_24 = arith.constant 0 : i32
    %c31_i32_25 = arith.constant 31 : i32
    %57 = arith.maxsi %c0_i32_24, %56 : i32
    %58 = arith.minsi %c31_i32_25, %57 : i32
    %59 = arith.index_cast %58 : i32 to index
    %c0_26 = arith.constant 0 : index
    %60 = vector.load %arg3[%59, %c0_26] : memref<32x16xf32, #tpu.memory_space<vmem>>, vector<1x16xf32>
    %61 = arith.index_cast %c5_i32 : i32 to index
    %c0_27 = arith.constant 0 : index
    %62 = vector.load %arg8[%61, %c0_27] : memref<8x16xf32, #tpu.memory_space<vmem>>, vector<1x16xf32>
    tpu.vector_store %arg8[%61, %c0_27], %60 {strides = array<i32>} : memref<8x16xf32, #tpu.memory_space<vmem>>, vector<1x16xf32>,
    %c6_i32 = arith.constant 6 : i32
    %63 = arith.addi %2, %c6_i32 : i32
    %c15_i32_28 = arith.constant 15 : i32
    %64 = arith.minsi %63, %c15_i32_28 : i32
    %65 = arith.index_cast %64 : i32 to index
    %66 = memref.load %arg2[%65] : memref<16xi32, #tpu.memory_space<smem>>
    %c0_i32_29 = arith.constant 0 : i32
    %c31_i32_30 = arith.constant 31 : i32
    %67 = arith.maxsi %c0_i32_29, %66 : i32
    %68 = arith.minsi %c31_i32_30, %67 : i32
    %69 = arith.index_cast %68 : i32 to index
    %c0_31 = arith.constant 0 : index
    %70 = vector.load %arg3[%69, %c0_31] : memref<32x16xf32, #tpu.memory_space<vmem>>, vector<1x16xf32>
    %71 = arith.index_cast %c6_i32 : i32 to index
    %c0_32 = arith.constant 0 : index
    %72 = vector.load %arg8[%71, %c0_32] : memref<8x16xf32, #tpu.memory_space<vmem>>, vector<1x16xf32>
    tpu.vector_store %arg8[%71, %c0_32], %70 {strides = array<i32>} : memref<8x16xf32, #tpu.memory_space<vmem>>, vector<1x16xf32>,
    %c7_i32 = arith.constant 7 : i32
    %73 = arith.addi %2, %c7_i32 : i32
    %c15_i32_33 = arith.constant 15 : i32
    %74 = arith.minsi %73, %c15_i32_33 : i32
    %75 = arith.index_cast %74 : i32 to index
    %76 = memref.load %arg2[%75] : memref<16xi32, #tpu.memory_space<smem>>
    %c0_i32_34 = arith.constant 0 : i32
    %c31_i32_35 = arith.constant 31 : i32
    %77 = arith.maxsi %c0_i32_34, %76 : i32
    %78 = arith.minsi %c31_i32_35, %77 : i32
    %79 = arith.index_cast %78 : i32 to index
    %c0_36 = arith.constant 0 : index
    %80 = vector.load %arg3[%79, %c0_36] : memref<32x16xf32, #tpu.memory_space<vmem>>, vector<1x16xf32>
    %81 = arith.index_cast %c7_i32 : i32 to index
    %c0_37 = arith.constant 0 : index
    %82 = vector.load %arg8[%81, %c0_37] : memref<8x16xf32, #tpu.memory_space<vmem>>, vector<1x16xf32>
    tpu.vector_store %arg8[%81, %c0_37], %80 {strides = array<i32>} : memref<8x16xf32, #tpu.memory_space<vmem>>, vector<1x16xf32>,
    %c8_i32_38 = arith.constant 8 : i32
    %c0_39 = arith.constant 0 : index
    %c0_40 = arith.constant 0 : index
    %83 = vector.load %arg8[%c0_39, %c0_40] : memref<8x16xf32, #tpu.memory_space<vmem>>, vector<8x16xf32>
    %cst = arith.constant 4.000000e+00 : f32
    %84 = vector.broadcast %cst : f32 to vector<8x16xf32>
    %85 = arith.mulf %83, %84 : vector<8x16xf32>
    %c0_41 = arith.constant 0 : index
    %c0_42 = arith.constant 0 : index
    %86 = vector.load %arg4[%c0_41, %c0_42] : memref<8x16xf32, #tpu.memory_space<vmem>>, vector<8x16xf32>
    %87 = arith.addf %85, %86 : vector<8x16xf32>
    %c0_43 = arith.constant 0 : index
    %c0_44 = arith.constant 0 : index
    %88 = vector.load %arg5[%c0_43, %c0_44] : memref<16x32xf32, #tpu.memory_space<vmem>>, vector<16x32xf32>
    %cst_45 = arith.constant dense<0.000000e+00> : vector<8x32xf32>
    %89 = tpu.matmul %87, %88, %cst_45 {dimension_numbers = #tpu.dot_dimension_numbers<[1], [0], [0], [1], [0, 0, 1, 1], [], []>} : vector<8x16xf32>, vector<16x32xf32>, vector<8x32xf32> -> vector<8x32xf32>
    %c0_46 = arith.constant 0 : index
    %c0_47 = arith.constant 0 : index
    %90 = vector.load %arg6[%c0_46, %c0_47] : memref<1x32xf32, #tpu.memory_space<vmem>>, vector<1x32xf32>
    %91 = vector.broadcast %90 : vector<1x32xf32> to vector<8x32xf32>
    %92 = arith.addf %89, %91 : vector<8x32xf32>
    %c0_48 = arith.constant 0 : index
    %c0_49 = arith.constant 0 : index
    %c0_50 = arith.constant 0 : index
    %93 = vector.load %arg7[%c0_48, %c0_49, %c0_50] : memref<1x8x32xf32, #tpu.memory_space<vmem>>, vector<1x8x32xf32>
    %94 = vector.shape_cast %93 : vector<1x8x32xf32> to vector<8x32xf32>
    %95 = vector.shape_cast %92 : vector<8x32xf32> to vector<1x8x32xf32>
    tpu.vector_store %arg7[%c0_48, %c0_49, %c0_50], %95 {strides = array<i32>} : memref<1x8x32xf32, #tpu.memory_space<vmem>>, vector<1x8x32xf32>,
    return
  }
  func.func @transform_0(%arg0: i32, %arg1: i32, %arg2: memref<16xi32, #tpu.memory_space<smem>>) -> (i32, i32) {
    %c0_i32 = arith.constant 0 : i32
    %c0_i32_0 = arith.constant 0 : i32
    %c0_i32_1 = arith.constant 0 : i32
    return %c0_i32, %c0_i32_0 : i32, i32
  }
  func.func @transform_1(%arg0: i32, %arg1: i32, %arg2: memref<16xi32, #tpu.memory_space<smem>>) -> (i32, i32) {
    %c0_i32 = arith.constant 0 : i32
    %c0_i32_0 = arith.constant 0 : i32
    return %arg1, %c0_i32 : i32, i32
  }
  func.func @transform_2(%arg0: i32, %arg1: i32, %arg2: memref<16xi32, #tpu.memory_space<smem>>) -> (i32, i32) {
    %c0_i32 = arith.constant 0 : i32
    %c0_i32_0 = arith.constant 0 : i32
    %c0_i32_1 = arith.constant 0 : i32
    return %c0_i32, %c0_i32_0 : i32, i32
  }
  func.func @transform_3(%arg0: i32, %arg1: i32, %arg2: memref<16xi32, #tpu.memory_space<smem>>) -> (i32, i32) {
    %c0_i32 = arith.constant 0 : i32
    %c0_i32_0 = arith.constant 0 : i32
    %c0_i32_1 = arith.constant 0 : i32
    return %c0_i32, %c0_i32_0 : i32, i32
  }
  func.func @transform_4(%arg0: i32, %arg1: i32, %arg2: memref<16xi32, #tpu.memory_space<smem>>) -> (i32, i32, i32) {
    %c0_i32 = arith.constant 0 : i32
    %c0_i32_0 = arith.constant 0 : i32
    return %arg0, %arg1, %c0_i32 : i32, i32, i32
  }
}

</mosaic_0001>

<llo_original>
// kernel: tpu_custom_call.1
$region0: #{tpu_custom_call.1}
  #allocation0 [shape = 'u32[]', space=smem, size = 0x4, offset = 0x4, fixed_abs, tag = 'smem constant byte address 0x4 - core index']
  #allocation1 [shape = 'u32[144,128]{1,0:T(1,128)}', space=vmem, size = 0x12000, scoped, tag = 'internal scratch']
  #allocation2 [shape = 'f32[8,16]{1,0:T(8,128)}', space=vmem, size = 0x1000, scoped, tag = 'scratch operand']
  #allocation3 [shape = 's32[1]{0}', space=sflag, size = 0x4, scoped, tag = 'scoped memory for tpu_custom_call.1']
  #allocation4 [shape = 'u8[512]{0}', space=smem, size = 0x200, scoped, tag = 'prefetched SMEM operand 0']
  %s0 = inlined_call_operand.vmem [shape: s32[16], index: 0, kind: input, shape index: {}]
  %s1 = inlined_call_operand.vmem [shape: f32[32,16], index: 1, kind: input, shape index: {}]
  %s2 = inlined_call_operand.vmem [shape: f32[8,16], index: 2, kind: input, shape index: {}]
  %s3 = inlined_call_operand.vmem [shape: f32[16,32], index: 3, kind: input, shape index: {}]
  %s4 = inlined_call_operand.vmem [shape: f32[1,32], index: 4, kind: input, shape index: {}]
  %s5 = inlined_call_operand.hbm [shape: f32[2,8,32], index: 5, kind: output, shape index: {}]
  %s6 = sld [smem:[#allocation0]]
  $region49: #{tpu_custom_call.1} parent=0
    _
  %s8 = ssub.s32 1, %s6
  %s9 = scalar_select 0, %s8, %s6
  %s10 = sshll.u32 %s0, 4
  %s11 = int_to_ptr.vmem [resolvable:$true] %s10
  %13 = dma.vmem_to_smem %s11, 16, [#allocation4], [#allocation3]
  %14 = dma.done [#allocation3], 16
  %15 = sfence
  $region1: #{tpu_custom_call.1} parent=0
    #allocation5 [shape = 'u8[8192]{0}', space=vmem, size = 0x2000, scoped, tag = 'output window, operand 0']
    #allocation6 [shape = 's32[2]{0}', space=sflag, size = 0x8, scoped, tag = 'scoped memory for tpu_custom_call.1']
    %16 = vsyncpa [#allocation6], 0
    %s17 = scalar_lea.sflag [#allocation6], 1
    %18 = vsyncpa %s17, 0
    loop: start=0, step=1, limit=4
    $region2: #{tpu_custom_call.1} parent=1 // loop_pre_header
      _
    $region3: #{tpu_custom_call.1} parent=1 // loop_header
      %s20 = sphi 0, %s24
      %p21 = scmp.ge.s32.totalorder %s20, 4
      %s27 = sphi 0, %s39
      %s28 = sphi 0, %s35
      %s29 = sphi 0, %s27
      %s30 = sphi 0, %s28
      %s31 = sphi 0, %s29
      %s32 = sphi 0, %s30
      %s40 = sphi 0, %s40
      %s42 = sphi 0, %s40
      %s43 = sphi 0, %s42
      %s57 = sphi 0, %s43
      %s63 = sphi 0, %s65
      %s66 = sphi 0, %s63
      %s67 = sphi 0, %s66
      %s83 = sphi 0, %s67
      %s87 = sphi 0, %s87
      %s89 = sphi 0, %s87
      %s90 = sphi 0, %s89
      %s104 = sphi 0, %s90
      %s108 = sphi 0, %s108
      %s110 = sphi 0, %s108
      %s111 = sphi 0, %s110
      %s125 = sphi 0, %s111
      %s133 = sphi 0, %s135
      %s136 = sphi 0, %s133
      %s137 = sphi 0, %s136
      %s153 = sphi 0, %s137
    $region4: #{tpu_custom_call.1} parent=1 // loop_header_branch
      %23 = sbr.rel (%p21) target = $region8
    $region5: #{tpu_custom_call.1} parent=1 // loop_body
      %s25 = ssub.s32 %s20, 1
      %s26 = ssub.s32 %s20, 2
      %s33 = sadd.s32 1, %s28
      %p34 = scmp.ge.s32.totalorder %s33, 1
      %s35 = scalar_select %p34, 0, %s33
      %s36 = sadd.s32 1, %s27
      %s37 = scalar_select %p34, %s36, %s27
      %p38 = scmp.ge.s32.totalorder %s37, 2
      %s39 = scalar_select %p38, 0, %s37
      %s41 = sadd.s32 %s40, 1
      %p44 = scmp.eq.s32.totalorder %s20, 1
      %p45 = scmp.ne.s32.totalorder %s40, %s42
      %p46 = scmp.eq.s32.totalorder %s20, 0
      %p47 = por %p45, %p46
      %p48 = scmp.ne.s32.totalorder %s40, %s42
      %p49 = scmp.eq.s32.totalorder %s25, 1
      %p50 = por %p48, %p49
      %p51 = scmp.ne.s32.totalorder %s42, %s43
      %p52 = scmp.eq.s32.totalorder %s25, 0
      %p53 = por %p51, %p52
      %p54 = scmp.ne.s32.totalorder %s42, %s43
      %p55 = scmp.eq.s32.totalorder %s26, 1
      %p56 = por %p54, %p55
      %p58 = scmp.ne.s32.totalorder %s43, %s57
      %p59 = scmp.eq.s32.totalorder %s26, 0
      %p60 = por %p58, %p59
      %s61 = ssub.s32 %s28, %s35
      %p62 = scmp.eq.s32.totalorder %s61, 0
      %s64 = sadd.s32 %s63, 1
      %s65 = scalar_select %p62, %s63, %s64
      %p68 = pneg %p62
      %p69 = scmp.eq.s32.totalorder %s20, 1
      %p70 = por %p68, %p69
      %p71 = scmp.ne.s32.totalorder %s63, %s66
      %p72 = scmp.eq.s32.totalorder %s20, 0
      %p73 = por %p71, %p72
      %p74 = scmp.ne.s32.totalorder %s63, %s66
      %p75 = scmp.eq.s32.totalorder %s25, 1
      %p76 = por %p74, %p75
      %p77 = scmp.ne.s32.totalorder %s66, %s67
      %p78 = scmp.eq.s32.totalorder %s25, 0
      %p79 = por %p77, %p78
      %p80 = scmp.ne.s32.totalorder %s66, %s67
      %p81 = scmp.eq.s32.totalorder %s26, 1
      %p82 = por %p80, %p81
      %p84 = scmp.ne.s32.totalorder %s67, %s83
      %p85 = scmp.eq.s32.totalorder %s26, 0
      %p86 = por %p84, %p85
      %s88 = sadd.s32 %s87, 1
      %p91 = scmp.eq.s32.totalorder %s20, 1
      %p92 = scmp.ne.s32.totalorder %s87, %s89
      %p93 = scmp.eq.s32.totalorder %s20, 0
      %p94 = por %p92, %p93
      %p95 = scmp.ne.s32.totalorder %s87, %s89
      %p96 = scmp.eq.s32.totalorder %s25, 1
      %p97 = por %p95, %p96
      %p98 = scmp.ne.s32.totalorder %s89, %s90
      %p99 = scmp.eq.s32.totalorder %s25, 0
      %p100 = por %p98, %p99
      %p101 = scmp.ne.s32.totalorder %s89, %s90
      %p102 = scmp.eq.s32.totalorder %s26, 1
      %p103 = por %p101, %p102
      %p105 = scmp.ne.s32.totalorder %s90, %s104
      %p106 = scmp.eq.s32.totalorder %s26, 0
      %p107 = por %p105, %p106
      %s109 = sadd.s32 %s108, 1
      %p112 = scmp.eq.s32.totalorder %s20, 1
      %p113 = scmp.ne.s32.totalorder %s108, %s110
      %p114 = scmp.eq.s32.totalorder %s20, 0
      %p115 = por %p113, %p114
      %p116 = scmp.ne.s32.totalorder %s108, %s110
      %p117 = scmp.eq.s32.totalorder %s25, 1
      %p118 = por %p116, %p117
      %p119 = scmp.ne.s32.totalorder %s110, %s111
      %p120 = scmp.eq.s32.totalorder %s25, 0
      %p121 = por %p119, %p120
      %p122 = scmp.ne.s32.totalorder %s110, %s111
      %p123 = scmp.eq.s32.totalorder %s26, 1
      %p124 = por %p122, %p123
      %p126 = scmp.ne.s32.totalorder %s111, %s125
      %p127 = scmp.eq.s32.totalorder %s26, 0
      %p128 = por %p126, %p127
      %s129 = ssub.s32 %s27, %s39
      %s130 = ssub.s32 %s28, %s35
      %s131 = sor.u32 %s129, %s130
      %p132 = scmp.eq.s32.totalorder %s131, 0
      %s134 = sadd.s32 %s133, 1
      %s135 = scalar_select %p132, %s133, %s134
      %p138 = pneg %p132
      %p139 = scmp.eq.s32.totalorder %s20, 1
      %p140 = por %p138, %p139
      %p141 = scmp.ne.s32.totalorder %s133, %s136
      %p142 = scmp.eq.s32.totalorder %s20, 0
      %p143 = por %p141, %p142
      %p144 = scmp.ne.s32.totalorder %s133, %s136
      %p145 = scmp.eq.s32.totalorder %s25, 1
      %p146 = por %p144, %p145
      %p147 = scmp.ne.s32.totalorder %s136, %s137
      %p148 = scmp.eq.s32.totalorder %s25, 0
      %p149 = por %p147, %p148
      %p150 = scmp.ne.s32.totalorder %s136, %s137
      %p151 = scmp.eq.s32.totalorder %s26, 1
      %p152 = por %p150, %p151
      %p154 = scmp.ne.s32.totalorder %s137, %s153
      %p155 = scmp.eq.s32.totalorder %s26, 0
      %p156 = por %p154, %p155
      %p157 = scmp.le.s32.totalorder 1, %s20
      %p158 = scmp.lt.s32.totalorder %s20, 3
      %p159 = pnand %p157, %p158
      %p160 = pneg %p159
      // Predicated region
      $region9: #{tpu_custom_call.1} parent=5 // pred_check
        _
      $region10: #{tpu_custom_call.1} parent=5 // pred_check_branch
        %162 = sbr.rel (%p159) target = $region12
      $region11: #{tpu_custom_call.1} parent=5 // pred_region
        %s163 = ssub.s32 %s20, 1
        // Predicated region
        $region13: #{tpu_custom_call.1} parent=11 // pred_check
          %p164 = pneg %p53
        $region14: #{tpu_custom_call.1} parent=11 // pred_check_branch
          %166 = sbr.rel (%p164) target = $region16
        $region15: #{tpu_custom_call.1} parent=11 // pred_region
          _
        $region16: #{tpu_custom_call.1} parent=11 // pred_fallthru
          _
        // Predicated region
        $region17: #{tpu_custom_call.1} parent=11 // pred_check
          %p167 = pneg %p79
        $region18: #{tpu_custom_call.1} parent=11 // pred_check_branch
          %169 = sbr.rel (%p167) target = $region20
        $region19: #{tpu_custom_call.1} parent=11 // pred_region
          %p170 = scmp.lt.s32.totalorder %s30, 0
          %s171 = scalar_select %p170, %s30, 0
          %s172 = smul.addr %s171, 8
          %s173 = scalar_lea.vmem %s2, %s172
        $region20: #{tpu_custom_call.1} parent=11 // pred_fallthru
          _
        // Predicated region
        $region21: #{tpu_custom_call.1} parent=11 // pred_check
          %p174 = pneg %p100
        $region22: #{tpu_custom_call.1} parent=11 // pred_check_branch
          %176 = sbr.rel (%p174) target = $region24
        $region23: #{tpu_custom_call.1} parent=11 // pred_region
          _
        $region24: #{tpu_custom_call.1} parent=11 // pred_fallthru
          _
        // Predicated region
        $region25: #{tpu_custom_call.1} parent=11 // pred_check
          %p177 = pneg %p121
        $region26: #{tpu_custom_call.1} parent=11 // pred_check_branch
          %179 = sbr.rel (%p177) target = $region28
        $region27: #{tpu_custom_call.1} parent=11 // pred_region
          _
        $region28: #{tpu_custom_call.1} parent=11 // pred_fallthru
          _
      $region12: #{tpu_custom_call.1} parent=5 // pred_fallthru
        _
      %p180 = scmp.lt.s32.totalorder %s20, 2
      // Predicated region
      $region29: #{tpu_custom_call.1} parent=5 // pred_check
        %p181 = pneg %p180
      $region30: #{tpu_custom_call.1} parent=5 // pred_check_branch
        %183 = sbr.rel (%p181) target = $region32
      $region31: #{tpu_custom_call.1} parent=5 // pred_region
        _
      $region32: #{tpu_custom_call.1} parent=5 // pred_fallthru
        _
      %p184 = scmp.le.s32.totalorder 1, %s20
      %p185 = scmp.lt.s32.totalorder %s20, 3
      %p186 = pnand %p184, %p185
      %p187 = pneg %p186
      // Predicated region
      $region33: #{tpu_custom_call.1} parent=5 // pred_check
        _
      $region34: #{tpu_custom_call.1} parent=5 // pred_check_branch
        %189 = sbr.rel (%p186) target = $region36
      $region35: #{tpu_custom_call.1} parent=5 // pred_region
        %s190 = ssub.s32 %s20, 1
        %p191 = pneg %p53
        %p192 = pneg %p50
        %p193 = scmp.lt.s32.totalorder %s30, 0
        %s194 = scalar_select %p193, %s30, 0
        %s195 = smul.addr %s194, 8
        %s196 = scalar_lea.vmem %s2, %s195
        %p197 = pneg %p79
        %p198 = pneg %p76
        %p199 = pneg %p100
        %p200 = pneg %p97
        %p201 = pneg %p121
        %p202 = pneg %p118
        %p203 = pneg %p149
        %p204 = pneg %p146
        %s205 = sand.u32 %s136, 1
        %s206 = scalar_lea.sflag [#allocation6], %s205
        %s207 = sand.u32 %s136, 1
        %s208 = smul.addr %s207, 8
        %s209 = scalar_lea.vmem [#allocation5], %s208
        %p210 = scmp.lt.s32.totalorder %s30, 0
        %s211 = scalar_select %p210, %s30, 0
        %s212 = smul.addr %s211, 8
        %s213 = scalar_lea.vmem %s2, %s212
        %s214 = smul.u32 %s29, 8
        %s215 = smul.u32 %s30, 8
        %s216 = sadd.s32 %s214, %s215
        %p217 = scmp.lt.s32.totalorder %s216, 15
        %s218 = scalar_select %p217, %s216, 15
        %s219 = sld [smem:[#allocation4 + %s218]]
        %p220 = scmp.gt.s32.totalorder %s219, 0
        %s221 = scalar_select %p220, %s219, 0
        %p222 = scmp.lt.s32.totalorder %s221, 31
        %s223 = scalar_select %p222, %s221, 31
        %s224 = scalar_lea.vmem %s1, %s223
        %v225 = vld [vmem:[%s224] sm:$0x1]
        %vm226 = vcmask 122880
        %227 = vst.msk [vmem:[#allocation2] sm:$0x1] %vm226, %v225
        %s228 = sadd.s32 %s216, 1
        %p229 = scmp.lt.s32.totalorder %s228, 15
        %s230 = scalar_select %p229, %s228, 15
        %s231 = sld [smem:[#allocation4 + %s230]]
        %p232 = scmp.gt.s32.totalorder %s231, 0
        %s233 = scalar_select %p232, %s231, 0
        %p234 = scmp.lt.s32.totalorder %s233, 31
        %s235 = scalar_select %p234, %s233, 31
        %s236 = scalar_lea.vmem %s1, %s235
        %v237 = vld [vmem:[%s236] sm:$0x1]
        %238 = vst.msk [vmem:[#allocation2 + $0x1] sm:$0x1] %vm226, %v237
        %s239 = sadd.s32 %s216, 2
        %p240 = scmp.lt.s32.totalorder %s239, 15
        %s241 = scalar_select %p240, %s239, 15
        %s242 = sld [smem:[#allocation4 + %s241]]
        %p243 = scmp.gt.s32.totalorder %s242, 0
        %s244 = scalar_select %p243, %s242, 0
        %p245 = scmp.lt.s32.totalorder %s244, 31
        %s246 = scalar_select %p245, %s244, 31
        %s247 = scalar_lea.vmem %s1, %s246
        %v248 = vld [vmem:[%s247] sm:$0x1]
        %249 = vst.msk [vmem:[#allocation2 + $0x2] sm:$0x1] %vm226, %v248
        %s250 = sadd.s32 %s216, 3
        %p251 = scmp.lt.s32.totalorder %s250, 15
        %s252 = scalar_select %p251, %s250, 15
        %s253 = sld [smem:[#allocation4 + %s252]]
        %p254 = scmp.gt.s32.totalorder %s253, 0
        %s255 = scalar_select %p254, %s253, 0
        %p256 = scmp.lt.s32.totalorder %s255, 31
        %s257 = scalar_select %p256, %s255, 31
        %s258 = scalar_lea.vmem %s1, %s257
        %v259 = vld [vmem:[%s258] sm:$0x1]
        %260 = vst.msk [vmem:[#allocation2 + $0x3] sm:$0x1] %vm226, %v259
        %s261 = sadd.s32 %s216, 4
        %p262 = scmp.lt.s32.totalorder %s261, 15
        %s263 = scalar_select %p262, %s261, 15
        %s264 = sld [smem:[#allocation4 + %s263]]
        %p265 = scmp.gt.s32.totalorder %s264, 0
        %s266 = scalar_select %p265, %s264, 0
        %p267 = scmp.lt.s32.totalorder %s266, 31
        %s268 = scalar_select %p267, %s266, 31
        %s269 = scalar_lea.vmem %s1, %s268
        %v270 = vld [vmem:[%s269] sm:$0x1]
        %271 = vst.msk [vmem:[#allocation2 + $0x4] sm:$0x1] %vm226, %v270
        %s272 = sadd.s32 %s216, 5
        %p273 = scmp.lt.s32.totalorder %s272, 15
        %s274 = scalar_select %p273, %s272, 15
        %s275 = sld [smem:[#allocation4 + %s274]]
        %p276 = scmp.gt.s32.totalorder %s275, 0
        %s277 = scalar_select %p276, %s275, 0
        %p278 = scmp.lt.s32.totalorder %s277, 31
        %s279 = scalar_select %p278, %s277, 31
        %s280 = scalar_lea.vmem %s1, %s279
        %v281 = vld [vmem:[%s280] sm:$0x1]
        %282 = vst.msk [vmem:[#allocation2 + $0x5] sm:$0x1] %vm226, %v281
        %s283 = sadd.s32 %s216, 6
        %p284 = scmp.lt.s32.totalorder %s283, 15
        %s285 = scalar_select %p284, %s283, 15
        %s286 = sld [smem:[#allocation4 + %s285]]
        %p287 = scmp.gt.s32.totalorder %s286, 0
        %s288 = scalar_select %p287, %s286, 0
        %p289 = scmp.lt.s32.totalorder %s288, 31
        %s290 = scalar_select %p289, %s288, 31
        %s291 = scalar_lea.vmem %s1, %s290
        %v292 = vld [vmem:[%s291] sm:$0x1]
        %293 = vst.msk [vmem:[#allocation2 + $0x6] sm:$0x1] %vm226, %v292
        %s294 = sadd.s32 %s216, 7
        %p295 = scmp.lt.s32.totalorder %s294, 15
        %s296 = scalar_select %p295, %s294, 15
        %s297 = sld [smem:[#allocation4 + %s296]]
        %p298 = scmp.gt.s32.totalorder %s297, 0
        %s299 = scalar_select %p298, %s297, 0
        %p300 = scmp.lt.s32.totalorder %s299, 31
        %s301 = scalar_select %p300, %s299, 31
        %s302 = scalar_lea.vmem %s1, %s301
        %v303 = vld [vmem:[%s302] sm:$0x1]
        %304 = vst.msk [vmem:[#allocation2 + $0x7] sm:$0x1] %vm226, %v303
        %v305 = vld [vmem:[#allocation2] sm:$0xff]
        %v306 = vmul.f32 %v305, 4.0
        %v307 = vld [vmem:[%s213] sm:$0xff]
        %v308 = vadd.f32 %v306, %v307
        %v309 = vld [vmem:[%s3] sm:$0xff]
        %v310 = vld [vmem:[%s3 + $0x8] sm:$0xff]
        %v311 = vld [vmem:[%s4] sm:$0x1]
        %v313 = vlaneseq
        %v314 = vshrl.u32 %v313, 7
        %v315 = vsub.s32 0, %v314
        %v316 = vrot.slane %v311, %v315
        %vm318 = vcmask 130048
        %v320 = vsel %vm318, %v308, 0
        %322 = vmatprep.subr.mxu0 0.0
        %323 = vmatpush1.msra.mxu0 0.0
        %324 = vmatprep.subr.mxu0 0.0
        %325 = vmatpush1.msra.mxu0 0.0
        %326 = vmatprep.subr.mxu0 0.0
        %327 = vmatpush1.msra.mxu0 0.0
        %328 = vmatprep.subr.mxu0 0.0
        %329 = vmatpush1.msra.mxu0 0.0
        %330 = vmatprep.subr.mxu0 0.0
        %331 = vmatpush1.msra.mxu0 0.0
        %332 = vmatprep.subr.mxu0 0.0
        %333 = vmatpush1.msra.mxu0 0.0
        %334 = vmatprep.subr.mxu0 0.0
        %335 = vmatpush1.msra.mxu0 0.0
        %336 = vmatprep.subr.mxu0 0.0
        %337 = vmatpush1.msra.mxu0 0.0
        %338 = vmatprep.subr.mxu0 0.0
        %339 = vmatpush1.msra.mxu0 0.0
        %340 = vmatprep.subr.mxu0 0.0
        %341 = vmatpush1.msra.mxu0 0.0
        %342 = vmatprep.subr.mxu0 0.0
        %343 = vmatpush1.msra.mxu0 0.0
        %344 = vmatprep.subr.mxu0 0.0
        %345 = vmatpush1.msra.mxu0 0.0
        %346 = vmatprep.subr.mxu0 0.0
        %347 = vmatpush1.msra.mxu0 0.0
        %348 = vmatprep.subr.mxu0 0.0
        %349 = vmatpush1.msra.mxu0 0.0
        %350 = vmatprep.subr.mxu0 0.0
        %351 = vmatpush1.msra.mxu0 %v310
        %352 = vmatprep.subr.mxu0 0.0
        %353 = vmatpush1.msra.mxu0 %v309
        %354 = vmatprep.subr.mxu0 0.0
        %355 = vmatpush2.msra.mxu0 0.0
        %356 = vmatprep.subr.mxu0 0.0
        %357 = vmatpush2.msra.mxu0 0.0
        %358 = vmatprep.subr.mxu0 0.0
        %359 = vmatpush2.msra.mxu0 0.0
        %360 = vmatprep.subr.mxu0 0.0
        %361 = vmatpush2.msra.mxu0 0.0
        %362 = vmatprep.subr.mxu0 0.0
        %363 = vmatpush2.msra.mxu0 0.0
        %364 = vmatprep.subr.mxu0 0.0
        %365 = vmatpush2.msra.mxu0 0.0
        %366 = vmatprep.subr.mxu0 0.0
        %367 = vmatpush2.msra.mxu0 0.0
        %368 = vmatprep.subr.mxu0 0.0
        %369 = vmatpush2.msra.mxu0 0.0
        %370 = vmatprep.subr.mxu0 0.0
        %371 = vmatpush2.msra.mxu0 0.0
        %372 = vmatprep.subr.mxu0 0.0
        %373 = vmatpush2.msra.mxu0 0.0
        %374 = vmatprep.subr.mxu0 0.0
        %375 = vmatpush2.msra.mxu0 0.0
        %376 = vmatprep.subr.mxu0 0.0
        %377 = vmatpush2.msra.mxu0 0.0
        %378 = vmatprep.subr.mxu0 0.0
        %379 = vmatpush2.msra.mxu0 0.0
        %380 = vmatprep.subr.mxu0 0.0
        %381 = vmatpush2.msra.mxu0 0.0
        %382 = vmatprep.subr.mxu0 0.0
        %383 = vmatpush2.msra.mxu0 0.0
        %384 = vmatprep.subr.mxu0 0.0
        %385 = vmatpush2.msra.mxu0 0.0
        %386 = vmatprep.mubr.f32.mxu0 0.0
        %387 = vmatmul.mubr.f32.gmra.mxu0 %v320
        %v388 = vpop.f32.mrf.mxu0
        %v389 = vadd.f32 %v316, %v388
        %v390 = vpop.f32.mrf.mxu0
        %391 = vdwg.mxu0
        %vm392 = vcmask 261120
        %393 = vst.msk [vmem:[%s209] sm:$0xff] %vm392, %v389
        %s394 = sand.u32 %s136, 1
        %s395 = scalar_lea.sflag [#allocation6], %s394
        %s396 = sand.u32 %s136, 1
        %s397 = smul.addr %s396, 8
        %s398 = scalar_lea.vmem [#allocation5], %s397
        // Predicated region
        $region37: #{tpu_custom_call.1} parent=35 // pred_check
          %p399 = pneg %p146
        $region38: #{tpu_custom_call.1} parent=35 // pred_check_branch
          %401 = sbr.rel (%p399) target = $region40
        $region39: #{tpu_custom_call.1} parent=35 // pred_region
          %s403 = ssub.s32 128, 128
          %404 = vsyncadd %s395, %s403
          %s405 = sadd.s32 %s30, %s29
          %s406 = smul.addr %s405, 128
          %s407 = scalar_lea.hbm %s5, %s406
          %s409 = sshll.u32 %s398, 4
          %s410 = int_to_ptr.vmem [resolvable:$true] %s409
          %412 = dma.vmem_to_hbm [thread:$0]  %s410, 128, %s407, %s395
        $region40: #{tpu_custom_call.1} parent=35 // pred_fallthru
          _
      $region36: #{tpu_custom_call.1} parent=5 // pred_fallthru
        _
      %p413 = scmp.le.s32.totalorder 2, %s20
      // Predicated region
      $region41: #{tpu_custom_call.1} parent=5 // pred_check
        %p414 = pneg %p413
      $region42: #{tpu_custom_call.1} parent=5 // pred_check_branch
        %416 = sbr.rel (%p414) target = $region44
      $region43: #{tpu_custom_call.1} parent=5 // pred_region
        %s417 = ssub.s32 %s20, 2
        // Predicated region
        $region45: #{tpu_custom_call.1} parent=43 // pred_check
          %p418 = pneg %p152
        $region46: #{tpu_custom_call.1} parent=43 // pred_check_branch
          %420 = sbr.rel (%p418) target = $region48
        $region47: #{tpu_custom_call.1} parent=43 // pred_region
          %s421 = sand.u32 %s137, 1
          %s422 = scalar_lea.sflag [#allocation6], %s421
          %s423 = sand.u32 %s137, 1
          %s424 = smul.addr %s423, 8
          %s425 = scalar_lea.vmem [#allocation5], %s424
          %426 = dma.done %s422, 128
        $region48: #{tpu_custom_call.1} parent=43 // pred_fallthru
          _
      $region44: #{tpu_custom_call.1} parent=5 // pred_fallthru
        _
    $region6: #{tpu_custom_call.1} parent=1 // loop_footer
      %s24 = sadd.s32 1, %s20
    $region7: #{tpu_custom_call.1} parent=1 // loop_footer_branch
      %19 = sbr.rel target = $region3
    $region8: #{tpu_custom_call.1} parent=1 // loop_exit
      _
    %427 = vsyncpa [#allocation6], 1
    %s428 = scalar_lea.sflag [#allocation6], 1
    %429 = vsyncpa %s428, 1

</llo_original>
